<compile_context>
chip_gen: v6e
topology: v6e:2x2x1
jax: 0.10.0
libtpu: 0.0.40
codegen_flags: <defaults>
</compile_context>

<pallas_src>
import functools

import jax
import jax.numpy as jnp
from jax.experimental import pallas as pl
from jax.experimental.pallas import tpu as pltpu

ALPHA = 0.7
GAMMA = 1.2

# Headroom for f32 tile-sized intermediates Mosaic materializes for the elementwise chain.
_F32_TEMPS = 8
_MAX_BLOCK_ROWS = 4096


def _focal_loss_sum_kernel(x_ref, t_ref, out_ref, acc_ref, *,
                           alpha, gamma, n_rows, block_rows,
                           first_masked_block, needs_mask, assume_binary_targets):
    c = pl.program_id(0)                 # chunk axis ("parallel"; both TCs on v7x)
    i = pl.program_id(1)                 # row-block reduction axis ("arbitrary")
    j = pl.program_id(2)                 # label-block reduction axis ("arbitrary")
    steps_per_chunk = pl.num_programs(1)
    l_steps = pl.num_programs(2)

    @pl.when((i == 0) & (j == 0))
    def _init():
        acc_ref[...] = jnp.zeros_like(acc_ref)

    x = x_ref[...].astype(jnp.float32)
    t = t_ref[...].astype(jnp.float32)

    # Shared sub-expressions (log-space, exact for any x):
    #   relu_x  = max(x, 0),  relu_nx = max(-x, 0) = relu_x - x
    #   s       = softplus(-|x|) = log1p(exp(-|x|))
    #   log p   = -(relu_nx + s),  log(1-p) = -(relu_x + s)
    relu_x = jnp.maximum(x, 0.0)
    relu_nx = relu_x - x
    s = jnp.log1p(jnp.exp(-jnp.abs(x)))

    if assume_binary_targets:
        # Hard 0/1 labels: selects instead of the two-branch soft-label algebra.
        pos = t > 0.5
        bce = jnp.where(pos, relu_nx, relu_x) + s                      # -log(prob of true class)
        modulating = jnp.exp(-gamma * (jnp.where(pos, relu_x, relu_nx) + s))
        alpha_w = jnp.where(pos, alpha, 1.0 - alpha)
    else:
        omt = 1.0 - t
        log_p = -(relu_nx + s)
        log_1mp = -(relu_x + s)
        bce = s + t * relu_nx + omt * relu_x                           # == BCE-with-logits
        modulating = omt * jnp.exp(gamma * log_p) + t * jnp.exp(gamma * log_1mp)
        alpha_w = t * alpha + omt * (1.0 - alpha)

    focal = alpha_w * modulating * bce

    rows, cols = focal.shape

    def _accumulate(vals):
        # Fold block_rows down to 8 sublanes per step (VPU adds only, no cross-lane work).
        if rows % 8 == 0:
            acc_ref[...] += vals.reshape(rows // 8, 8, cols).sum(axis=0)
        else:
            # Only reachable for a single full-array block whose row count isn't a
            # multiple of 8 (tiny batches).
            acc_ref[0:1, :] += jnp.sum(vals, axis=0, keepdims=True)

    if needs_mask:
        blk = c * steps_per_chunk + i     # logical (unclamped) row-block index

        @pl.when(blk < first_masked_block)
        def _full_block():
            _accumulate(focal)

        @pl.when(blk >= first_masked_block)
        def _boundary_block():
            # Ragged last real block and/or fully padded blocks: zero rows >= n.
            row = blk * block_rows + jax.lax.broadcasted_iota(jnp.int32, focal.shape, 0)
            _accumulate(jnp.where(row < n_rows, focal, 0.0))
    else:
        _accumulate(focal)

    @pl.when((i == steps_per_chunk - 1) & (j == l_steps - 1))
    def _finish():
        # One tiny (8 x tile_l) cross-lane reduce per chunk; lane-dense output write.
        out_ref[...] = jnp.broadcast_to(jnp.sum(acc_ref[...]), out_ref.shape)


def _pick_tile_l(l, cap):
    """Largest multiple-of-128 divisor of l that is <= cap; l itself if none exists."""
    if l <= cap:
        return l
    d = max(128, (cap // 128) * 128)
    while d >= 128:
        if l % d == 0:
            return d
        d -= 128
    # TODO(synk): ragged label-dim tiling (lane masking when l has no multiple-of-128
    # divisor) not implemented; falls back to full-width rows.
    return l


def multilabel_focal_loss(inputs, targets, *, alpha=ALPHA, gamma=GAMMA,
                          reduction="mean", assume_binary_targets=True,
                          block_rows=None):
    """Focal loss for multilabel classification (forward pass only).

    inputs/targets: logits / labels of the same shape (any float/int dtype).
    assume_binary_targets=True uses the cheaper hard-0/1 specialization; set it to
    False for soft labels (exact original two-branch formula).
    """
    if inputs.shape != targets.shape:
        raise ValueError(
            f"Target size ({targets.shape}) must be the same as input size ({inputs.shape})")
    if reduction not in ("mean", "sum"):
        # TODO(synk): reduction='none' (full per-element output map) not implemented in-kernel.
        raise NotImplementedError("only reduction='mean' or 'sum' implemented")

    # Full reduce -> any 2-D factorization is equivalent; keep the label axis last (lanes).
    if inputs.ndim == 1:
        inputs = inputs.reshape(1, -1)
        targets = targets.reshape(1, -1)
    elif inputs.ndim > 2:
        inputs = inputs.reshape(-1, inputs.shape[-1])
        targets = targets.reshape(-1, targets.shape[-1])

    n, l = inputs.shape
    total_elems = n * l

    # ---- generation-aware VMEM budget (v5e/v6e: 128 MiB physical, v7x: 64 MiB) ----
    try:
        vmem_cap = int(pltpu.get_tpu_info().vmem_capacity_bytes)
    except Exception:
        vmem_cap = 64 << 20                       # conservative (v7x-sized) fallback
    pipeline_budget = min(vmem_cap // 2, 40 << 20)  # never size tiles past v7x's VMEM
    vmem_limit = int(min(vmem_cap, pipeline_budget + (16 << 20)))

    # Per-element working set: 2 inputs x 2 pipeline buffers (raw dtype) + f32 temps.
    per_elem_bytes = 2 * (inputs.dtype.itemsize + targets.dtype.itemsize) + 4 * _F32_TEMPS

    # ---- label-axis tiling keeps VMEM bounded for very wide label dims ----
    cap_l = max(128, ((pipeline_budget // (8 * per_elem_bytes)) // 128) * 128)
    tile_l = _pick_tile_l(l, cap_l)
    l_steps = max(1, l // tile_l)

    # ---- batch-axis tile: biggest that fits the budget ----
    user_rows = block_rows is not None
    if block_rows is None:
        block_rows = pipeline_budget // (tile_l * per_elem_bytes)
        block_rows = max(8, min(block_rows, _MAX_BLOCK_ROWS))
    if block_rows >= n:
        block_rows = n                            # full-dim block is always legal
    else:
        q = 8 if (user_rows or block_rows < 32) else 32   # 32 keeps int8/bf16 packing aligned
        block_rows = max(8, (block_rows // q) * q)

    total_row_blocks = pl.cdiv(n, block_rows)
    # Always split row blocks over 2 chunks when possible: the chunk axis is "parallel"
    # (both TensorCores on v7x; a cheap serial outer loop on 1-TC chips).  Odd/uneven
    # block counts are padded and masked in-kernel; index_map is clamped to stay valid.
    num_chunks = 2 if total_row_blocks >= 2 else 1
    steps_per_chunk = pl.cdiv(total_row_blocks, num_chunks)
    padded_blocks = num_chunks * steps_per_chunk
    first_masked_block = n // block_rows
    needs_mask = padded_blocks * block_rows != n

    def row_map(c, i, j):
        blk = jnp.minimum(c * steps_per_chunk + i, total_row_blocks - 1)
        return (blk, j)

    kernel = functools.partial(
        _focal_loss_sum_kernel,
        alpha=float(alpha), gamma=float(gamma),
        n_rows=n, block_rows=block_rows,
        first_masked_block=first_masked_block, needs_mask=needs_mask,
        assume_binary_targets=assume_binary_targets)

    partials = pl.pallas_call(
        kernel,
        out_shape=jax.ShapeDtypeStruct((num_chunks, 8, 128), jnp.float32),
        grid_spec=pltpu.PrefetchScalarGridSpec(
            num_scalar_prefetch=0,
            grid=(num_chunks, steps_per_chunk, l_steps),
            in_specs=[
                pl.BlockSpec((block_rows, tile_l), row_map),
                pl.BlockSpec((block_rows, tile_l), row_map),
            ],
            out_specs=pl.BlockSpec((1, 8, 128), lambda c, i, j: (c, 0, 0)),
            # Small (8, tile_l) accumulator: frees VMEM for bigger input tiles and makes
            # the zero-init / end-of-chunk cross-lane reduce trivial.
            scratch_shapes=[pltpu.VMEM((8, tile_l), jnp.float32)],
        ),
        compiler_params=pltpu.CompilerParams(
            dimension_semantics=("parallel", "arbitrary", "arbitrary"),
            vmem_limit_bytes=vmem_limit),
    )(inputs, targets)

    total = jnp.sum(partials[:, 0, 0])
    if reduction == "sum":
        return total.astype(jnp.float32)
    return (total / jnp.float32(total_elems)).astype(jnp.float32)


def _reference(inputs, targets, alpha=ALPHA, gamma=GAMMA, reduction="mean"):
    x = inputs.astype(jnp.float32)
    t = targets.astype(jnp.float32)
    bce = jnp.maximum(x, 0.0) - x * t + jnp.log1p(jnp.exp(-jnp.abs(x)))
    p = jax.nn.sigmoid(x)
    mod = (1.0 - t) * jnp.power(p, gamma) + t * jnp.power(1.0 - p, gamma)
    aw = t * alpha + (1.0 - t) * (1.0 - alpha)
    focal = aw * mod * bce
    return jnp.sum(focal) if reduction == "sum" else jnp.mean(focal)


if __name__ == "__main__":
    key = jax.random.PRNGKey(0)
    k1, k2, k3, k4, k5, k6, k7, k8 = jax.random.split(key, 8)

    # Test 1: single full-array tile, binary targets, mean + sum reductions.
    N, L = 16, 256
    logits = jax.random.normal(k1, (N, L), dtype=jnp.float32) * 2.0
    targets = (jax.random.uniform(k2, (N, L)) > 0.5).astype(jnp.float32)
    loss = jax.block_until_ready(multilabel_focal_loss(logits, targets))
    ref = _reference(logits, targets)
    assert jnp.allclose(loss, ref, rtol=1e-5, atol=1e-6), (loss, ref)
    loss_s = jax.block_until_ready(multilabel_focal_loss(logits, targets, reduction="sum"))
    ref_s = _reference(logits, targets, reduction="sum")
    assert jnp.allclose(loss_s, ref_s, rtol=1e-5, atol=1e-4), (loss_s, ref_s)

    # Test 2: ragged batch + odd block count -> 2 uneven chunks, clamped padded block,
    # pl.when-gated in-kernel row masking.
    N2, L2 = 40, 128
    logits2 = jax.random.normal(k3, (N2, L2), dtype=jnp.float32) * 3.0
    targets2 = (jax.random.uniform(k4, (N2, L2)) > 0.7).astype(jnp.float32)
    loss2 = jax.block_until_ready(multilabel_focal_loss(logits2, targets2, block_rows=16))
    ref2 = _reference(logits2, targets2)
    assert jnp.allclose(loss2, ref2, rtol=1e-5, atol=1e-6), (loss2, ref2)

    # Test 3: narrow input dtypes (bf16 logits + int8 labels) -> reduced HBM traffic path,
    # two even chunks, binary-target specialization.
    N3, L3 = 64, 128
    logits3 = (jax.random.normal(k5, (N3, L3), dtype=jnp.float32) * 2.0).astype(jnp.bfloat16)
    targets3 = (jax.random.uniform(k6, (N3, L3)) > 0.5).astype(jnp.int8)
    loss3 = jax.block_until_ready(multilabel_focal_loss(logits3, targets3, block_rows=32))
    ref3 = _reference(logits3, targets3)
    assert jnp.allclose(loss3, ref3, rtol=1e-5, atol=1e-6), (loss3, ref3)

    # Test 4: soft labels -> exact general (non-specialized) math path.
    N4, L4 = 24, 384
    logits4 = jax.random.normal(k7, (N4, L4), dtype=jnp.float32) * 2.0
    targets4 = jax.random.uniform(k8, (N4, L4), dtype=jnp.float32)
    loss4 = jax.block_until_ready(
        multilabel_focal_loss(logits4, targets4, assume_binary_targets=False))
    ref4 = _reference(logits4, targets4)
    assert jnp.allclose(loss4, ref4, rtol=1e-5, atol=1e-6), (loss4, ref4)

    print("KERNEL_OK")
</pallas_src>

<mosaic_0001>
module attributes {stable_mosaic.version = 11 : i64} {
  func.func @_focal_loss_sum_kernel(%arg0: i32, %arg1: i32, %arg2: i32, %arg3: memref<16x256xf32, #tpu.memory_space<vmem>>, %arg4: memref<16x256xf32, #tpu.memory_space<vmem>>, %arg5: memref<1x8x128xf32, #tpu.memory_space<vmem>>, %arg6: memref<8x256xf32, #tpu.memory_space<vmem>>) attributes {dimension_semantics = [#tpu.dimension_semantics<parallel>, #tpu.dimension_semantics<arbitrary>, #tpu.dimension_semantics<arbitrary>], iteration_bounds = array<i64: 1, 1, 1>, scalar_prefetch = 0 : i64, scratch_operands = 1 : i64, tpu.core_type = #tpu.core_type<tc>, window_params = [{transform_indices = @transform_0, window_bounds = array<i64: 16, 256>}, {transform_indices = @transform_1, window_bounds = array<i64: 16, 256>}, {transform_indices = @transform_2, window_bounds = array<i64: 1, 8, 128>}]} {
    %c0_i32 = arith.constant 0 : i32
    %0 = arith.cmpi eq, %arg1, %c0_i32 : i32
    %c0_i32_0 = arith.constant 0 : i32
    %1 = arith.cmpi eq, %arg2, %c0_i32_0 : i32
    %2 = arith.andi %0, %1 : i1
    %3 = arith.extui %2 : i1 to i32
    %c0_i32_1 = arith.constant 0 : i32
    %4 = arith.cmpi ne, %3, %c0_i32_1 : i32
    scf.if %4 {
      %cst_18 = arith.constant 0.000000e+00 : f32
      %39 = vector.broadcast %cst_18 : f32 to vector<8x256xf32>
      %c0_19 = arith.constant 0 : index
      %c0_20 = arith.constant 0 : index
      %40 = vector.load %arg6[%c0_19, %c0_20] : memref<8x256xf32, #tpu.memory_space<vmem>>, vector<8x256xf32>
      tpu.vector_store %arg6[%c0_19, %c0_20], %39 {strides = array<i32>} : memref<8x256xf32, #tpu.memory_space<vmem>>, vector<8x256xf32>,
    } else {
    }
    %c0 = arith.constant 0 : index
    %c0_2 = arith.constant 0 : index
    %5 = vector.load %arg3[%c0, %c0_2] : memref<16x256xf32, #tpu.memory_space<vmem>>, vector<16x256xf32>
    %c0_3 = arith.constant 0 : index
    %c0_4 = arith.constant 0 : index
    %6 = vector.load %arg4[%c0_3, %c0_4] : memref<16x256xf32, #tpu.memory_space<vmem>>, vector<16x256xf32>
    %cst = arith.constant 0.000000e+00 : f32
    %7 = vector.broadcast %cst : f32 to vector<16x256xf32>
    %8 = arith.maximumf %5, %7 : vector<16x256xf32>
    %9 = arith.subf %8, %5 : vector<16x256xf32>
    %10 = math.absf %5 : vector<16x256xf32>
    %cst_5 = arith.constant 0.000000e+00 : f32
    %11 = vector.broadcast %cst_5 : f32 to vector<16x256xf32>
    %12 = arith.subf %11, %10 : vector<16x256xf32>
    %13 = math.exp %12 : vector<16x256xf32>
    %14 = math.log1p %13 : vector<16x256xf32>
    %cst_6 = arith.constant 5.000000e-01 : f32
    %15 = vector.broadcast %cst_6 : f32 to vector<16x256xf32>
    %16 = arith.cmpf ogt, %6, %15 : vector<16x256xf32>
    %17 = arith.select %16, %9, %8 : vector<16x256xi1>, vector<16x256xf32>
    %18 = arith.addf %17, %14 : vector<16x256xf32>
    %19 = arith.select %16, %8, %9 : vector<16x256xi1>, vector<16x256xf32>
    %20 = arith.addf %19, %14 : vector<16x256xf32>
    %cst_7 = arith.constant -1.200000e+00 : f32
    %21 = vector.broadcast %cst_7 : f32 to vector<16x256xf32>
    %22 = arith.mulf %21, %20 : vector<16x256xf32>
    %23 = math.exp %22 : vector<16x256xf32>
    %cst_8 = arith.constant 0.699999988 : f32
    %cst_9 = arith.constant 3.000000e-01 : f32
    %24 = vector.broadcast %cst_8 : f32 to vector<16x256xf32>
    %25 = vector.broadcast %cst_9 : f32 to vector<16x256xf32>
    %26 = arith.select %16, %24, %25 : vector<16x256xi1>, vector<16x256xf32>
    %27 = arith.mulf %26, %23 : vector<16x256xf32>
    %28 = arith.mulf %27, %18 : vector<16x256xf32>
    %c0_10 = arith.constant 0 : index
    %c0_11 = arith.constant 0 : index
    %29 = vector.load %arg6[%c0_10, %c0_11] : memref<8x256xf32, #tpu.memory_space<vmem>>, vector<8x256xf32>
    %30 = vector.shape_cast %28 : vector<16x256xf32> to vector<2x8x256xf32>
    %cst_12 = arith.constant dense<0.000000e+00> : vector<8x256xf32>
    %31 = vector.multi_reduction <add>, %30, %cst_12 [0] : vector<2x8x256xf32> to vector<8x256xf32>
    %32 = arith.addf %29, %31 : vector<8x256xf32>
    %c0_13 = arith.constant 0 : index
    %c0_14 = arith.constant 0 : index
    %33 = vector.load %arg6[%c0_13, %c0_14] : memref<8x256xf32, #tpu.memory_space<vmem>>, vector<8x256xf32>
    tpu.vector_store %arg6[%c0_13, %c0_14], %32 {strides = array<i32>} : memref<8x256xf32, #tpu.memory_space<vmem>>, vector<8x256xf32>,
    %c0_i32_15 = arith.constant 0 : i32
    %34 = arith.cmpi eq, %arg1, %c0_i32_15 : i32
    %c0_i32_16 = arith.constant 0 : i32
    %35 = arith.cmpi eq, %arg2, %c0_i32_16 : i32
    %36 = arith.andi %34, %35 : i1
    %37 = arith.extui %36 : i1 to i32
    %c0_i32_17 = arith.constant 0 : i32
    %38 = arith.cmpi ne, %37, %c0_i32_17 : i32
    scf.if %38 {
      %c0_18 = arith.constant 0 : index
      %c0_19 = arith.constant 0 : index
      %39 = vector.load %arg6[%c0_18, %c0_19] : memref<8x256xf32, #tpu.memory_space<vmem>>, vector<8x256xf32>
      %40 = vector.shape_cast %39 : vector<8x256xf32> to vector<1x8x256xf32>
      %cst_20 = arith.constant dense<0.000000e+00> : vector<1xf32>
      %41 = vector.multi_reduction <add>, %40, %cst_20 [1, 2] : vector<1x8x256xf32> to vector<1xf32>
      %42 = vector.shape_cast %41 : vector<1xf32> to vector<1x1x1xf32>
      %43 = vector.extract %42[0, 0, 0] : f32 from vector<1x1x1xf32>
      %44 = vector.broadcast %43 : f32 to vector<1x8x128xf32>
      %c0_21 = arith.constant 0 : index
      %c0_22 = arith.constant 0 : index
      %c0_23 = arith.constant 0 : index
      %45 = vector.load %arg5[%c0_21, %c0_22, %c0_23] : memref<1x8x128xf32, #tpu.memory_space<vmem>>, vector<1x8x128xf32>
      tpu.vector_store %arg5[%c0_21, %c0_22, %c0_23], %44 {strides = array<i32>} : memref<1x8x128xf32, #tpu.memory_space<vmem>>, vector<1x8x128xf32>,
    } else {
    }
    return
  }
  func.func @transform_0(%arg0: i32, %arg1: i32, %arg2: i32) -> (i32, i32) {
    %c1_i32 = arith.constant 1 : i32
    %0 = arith.muli %arg0, %c1_i32 : i32
    %1 = arith.addi %0, %arg1 : i32
    %c0_i32 = arith.constant 0 : i32
    %2 = arith.minsi %1, %c0_i32 : i32
    %c0_i32_0 = arith.constant 0 : i32
    return %2, %arg2 : i32, i32
  }
  func.func @transform_1(%arg0: i32, %arg1: i32, %arg2: i32) -> (i32, i32) {
    %c1_i32 = arith.constant 1 : i32
    %0 = arith.muli %arg0, %c1_i32 : i32
    %1 = arith.addi %0, %arg1 : i32
    %c0_i32 = arith.constant 0 : i32
    %2 = arith.minsi %1, %c0_i32 : i32
    %c0_i32_0 = arith.constant 0 : i32
    return %2, %arg2 : i32, i32
  }
  func.func @transform_2(%arg0: i32, %arg1: i32, %arg2: i32) -> (i32, i32, i32) {
    %c0_i32 = arith.constant 0 : i32
    %c0_i32_0 = arith.constant 0 : i32
    %c0_i32_1 = arith.constant 0 : i32
    return %arg0, %c0_i32, %c0_i32_0 : i32, i32, i32
  }
}

</mosaic_0001>

<llo_original>
// kernel: tpu_custom_call.1
$region0: #{tpu_custom_call.1}
  #allocation0 [shape = 'u32[]', space=smem, size = 0x4, offset = 0x4, fixed_abs, tag = 'smem constant byte address 0x4 - core index']
  #allocation1 [shape = 'u32[144,128]{1,0:T(1,128)}', space=vmem, size = 0x12000, scoped, tag = 'internal scratch']
  #allocation2 [shape = 'f32[8,256]{1,0:T(8,128)}', space=vmem, size = 0x2000, scoped, tag = 'scratch operand']
  %s0 = inlined_call_operand.hbm [shape: f32[16,256], index: 0, kind: input, shape index: {}]
  %s1 = inlined_call_operand.hbm [shape: f32[16,256], index: 1, kind: input, shape index: {}]
  %s2 = inlined_call_operand.hbm [shape: f32[1,8,128], index: 2, kind: output, shape index: {}]
  %s3 = sld [smem:[#allocation0]]
  $region34: #{tpu_custom_call.1} parent=0
    _
  %s5 = ssub.s32 1, %s3
  %s6 = scalar_select 0, %s5, %s3
  $region1: #{tpu_custom_call.1} parent=0
    #allocation3 [shape = 'u8[16384]{0}', space=vmem, size = 0x4000, scoped, tag = 'input window, operand 0, single buffered']
    #allocation4 [shape = 's32[1]{0}', space=sflag, size = 0x4, scoped, tag = 'scoped memory for tpu_custom_call.1']
    #allocation5 [shape = 's32[1]{0}', space=sflag, size = 0x4, scoped, tag = 'scoped memory for tpu_custom_call.1']
    #allocation6 [shape = 'u8[16384]{0}', space=vmem, size = 0x4000, scoped, tag = 'input window, operand 1, single buffered']
    #allocation7 [shape = 's32[1]{0}', space=sflag, size = 0x4, scoped, tag = 'scoped memory for tpu_custom_call.1']
    #allocation8 [shape = 'u8[4096]{0}', space=vmem, size = 0x1000, scoped, tag = 'output window, operand 0, single buffered']
    %7 = vsyncpa [#allocation4], 0
    %8 = vsyncpa [#allocation7], 0
    %9 = vsyncpa [#allocation5], 0
    // Predicated region
    $region2: #{tpu_custom_call.1} parent=1 // pred_check
      _
    $region3: #{tpu_custom_call.1} parent=1 // pred_check_branch
      %11 = sbr.rel (0) target = $region5
    $region4: #{tpu_custom_call.1} parent=1 // pred_region
      %s12 = sadd.s32 0, 0
      %p13 = scmp.lt.s32.totalorder %s12, 0
      %s14 = scalar_select %p13, %s12, 0
      %s15 = smul.u32 2, %s14
      %s17 = ssub.s32 512, 512
      %18 = vsyncadd [#allocation4], %s17
      %s19 = smul.addr %s15, 2
      %s20 = smul.addr %s19, 128
      %s21 = scalar_lea.hbm %s0, %s20
      %s22 = sshll.u32 [#allocation3], 4
      %s23 = int_to_ptr.vmem [resolvable:$true] %s22
      %28 = dma.hbm_to_vmem [thread:$0]  %s21, 512, %s23, [#allocation4], 256, 256, 16
    $region5: #{tpu_custom_call.1} parent=1 // pred_fallthru
      _
    // Predicated region
    $region6: #{tpu_custom_call.1} parent=1 // pred_check
      _
    $region7: #{tpu_custom_call.1} parent=1 // pred_check_branch
      %30 = sbr.rel (0) target = $region9
    $region8: #{tpu_custom_call.1} parent=1 // pred_region
      %s31 = sadd.s32 0, 0
      %p32 = scmp.lt.s32.totalorder %s31, 0
      %s33 = scalar_select %p32, %s31, 0
      %s34 = smul.u32 2, %s33
      %s36 = ssub.s32 512, 512
      %37 = vsyncadd [#allocation7], %s36
      %s38 = smul.addr %s34, 2
      %s39 = smul.addr %s38, 128
      %s40 = scalar_lea.hbm %s1, %s39
      %s41 = sshll.u32 [#allocation6], 4
      %s42 = int_to_ptr.vmem [resolvable:$true] %s41
      %47 = dma.hbm_to_vmem [thread:$0]  %s40, 512, %s42, [#allocation7], 256, 256, 16
    $region9: #{tpu_custom_call.1} parent=1 // pred_fallthru
      _
    // Predicated region
    $region10: #{tpu_custom_call.1} parent=1 // pred_check
      _
    $region11: #{tpu_custom_call.1} parent=1 // pred_check_branch
      %49 = sbr.rel (0) target = $region13
    $region12: #{tpu_custom_call.1} parent=1 // pred_region
      %50 = dma.done [#allocation4], 512
    $region13: #{tpu_custom_call.1} parent=1 // pred_fallthru
      _
    // Predicated region
    $region14: #{tpu_custom_call.1} parent=1 // pred_check
      _
    $region15: #{tpu_custom_call.1} parent=1 // pred_check_branch
      %52 = sbr.rel (0) target = $region17
    $region16: #{tpu_custom_call.1} parent=1 // pred_region
      %53 = dma.done [#allocation7], 512
    $region17: #{tpu_custom_call.1} parent=1 // pred_fallthru
      _
    %s54 = sadd.s32 0, 0
    %p55 = scmp.lt.s32.totalorder %s54, 0
    %s56 = scalar_select %p55, %s54, 0
    %s57 = smul.u32 2, %s56
    %s58 = sadd.s32 0, 0
    %p59 = scmp.lt.s32.totalorder %s58, 0
    %s60 = scalar_select %p59, %s58, 0
    %s61 = smul.u32 2, %s60
    %p62 = scmp.eq.s32.totalorder 0, 0
    %p63 = scmp.eq.s32.totalorder 0, 0
    %p64 = pnand %p62, %p63
    %p65 = pneg %p64
    // Predicated region
    $region18: #{tpu_custom_call.1} parent=1 // pred_check
      _
    $region19: #{tpu_custom_call.1} parent=1 // pred_check_branch
      %67 = sbr.rel (%p64) target = $region21
    $region20: #{tpu_custom_call.1} parent=1 // pred_region
      %68 = vst [vmem:[#allocation2] sm:$0xff] 0.0
      %69 = vst [vmem:[#allocation2 + $0x8] sm:$0xff] 0.0
    $region21: #{tpu_custom_call.1} parent=1 // pred_fallthru
      _
    %v70 = vld [vmem:[#allocation3] sm:$0xff]
    %v71 = vld [vmem:[#allocation3 + $0x8] sm:$0xff]
    %v72 = vld [vmem:[#allocation3 + $0x10] sm:$0xff]
    %v73 = vld [vmem:[#allocation3 + $0x18] sm:$0xff]
    %v74 = vld [vmem:[#allocation6] sm:$0xff]
    %v75 = vld [vmem:[#allocation6 + $0x8] sm:$0xff]
    %v76 = vld [vmem:[#allocation6 + $0x10] sm:$0xff]
    %v77 = vld [vmem:[#allocation6 + $0x18] sm:$0xff]
    %v78 = vmax.f32 %v70, 0.0
    %v79 = vmax.f32 %v71, 0.0
    %v80 = vmax.f32 %v72, 0.0
    %v81 = vmax.f32 %v73, 0.0
    %v82 = vsub.f32 %v78, %v70
    %v83 = vsub.f32 %v79, %v71
    %v84 = vsub.f32 %v80, %v72
    %v85 = vsub.f32 %v81, %v73
    %v86 = vand.u32 2147483647, %v70
    %v87 = vand.u32 2147483647, %v71
    %v88 = vand.u32 2147483647, %v72
    %v89 = vand.u32 2147483647, %v73
    %v90 = vsub.f32 0.0, %v86
    %v91 = vsub.f32 0.0, %v87
    %v92 = vsub.f32 0.0, %v88
    %v93 = vsub.f32 0.0, %v89
    %v94 = vmul.f32 %v90, 1.442695
    %v95 = vpow.pop %v94
    %v96 = vmul.f32 %v91, 1.442695
    %v97 = vpow.pop %v96
    %v98 = vmul.f32 %v92, 1.442695
    %v99 = vpow.pop %v98
    %v100 = vmul.f32 %v93, 1.442695
    %v101 = vpow.pop %v100
    %v102 = vadd.f32 %v95, 1.0
    %v103 = vlog2.pop %v102
    %v104 = vmul.f32 %v103, 0.6931472
    %v105 = vmul.f32 -0.5, %v95
    %v106 = vadd.f32 %v105, 1.0
    %v107 = vmul.f32 %v106, %v95
    %v108 = vand.u32 2147483647, %v95
    %vm109 = vcmp.lt.f32.partialorder %v108, 0.0004427343
    %v110 = vsel %vm109, %v107, %v104
    %v111 = vadd.f32 %v97, 1.0
    %v112 = vlog2.pop %v111
    %v113 = vmul.f32 %v112, 0.6931472
    %v114 = vmul.f32 -0.5, %v97
    %v115 = vadd.f32 %v114, 1.0
    %v116 = vmul.f32 %v115, %v97
    %v117 = vand.u32 2147483647, %v97
    %vm118 = vcmp.lt.f32.partialorder %v117, 0.0004427343
    %v119 = vsel %vm118, %v116, %v113
    %v120 = vadd.f32 %v99, 1.0
    %v121 = vlog2.pop %v120
    %v122 = vmul.f32 %v121, 0.6931472
    %v123 = vmul.f32 -0.5, %v99
    %v124 = vadd.f32 %v123, 1.0
    %v125 = vmul.f32 %v124, %v99
    %v126 = vand.u32 2147483647, %v99
    %vm127 = vcmp.lt.f32.partialorder %v126, 0.0004427343
    %v128 = vsel %vm127, %v125, %v122
    %v129 = vadd.f32 %v101, 1.0
    %v130 = vlog2.pop %v129
    %v131 = vmul.f32 %v130, 0.6931472
    %v132 = vmul.f32 -0.5, %v101
    %v133 = vadd.f32 %v132, 1.0
    %v134 = vmul.f32 %v133, %v101
    %v135 = vand.u32 2147483647, %v101
    %vm136 = vcmp.lt.f32.partialorder %v135, 0.0004427343
    %v137 = vsel %vm136, %v134, %v131
    %vm138 = vcmp.gt.f32.partialorder %v74, 0.5
    %vm139 = vcmp.gt.f32.partialorder %v75, 0.5
    %vm140 = vcmp.gt.f32.partialorder %v76, 0.5
    %vm141 = vcmp.gt.f32.partialorder %v77, 0.5
    %v142 = vsel %vm138, %v82, %v78
    %v143 = vsel %vm139, %v83, %v79
    %v144 = vsel %vm140, %v84, %v80
    %v145 = vsel %vm141, %v85, %v81
    %v146 = vadd.f32 %v142, %v110
    %v147 = vadd.f32 %v143, %v119
    %v148 = vadd.f32 %v144, %v128
    %v149 = vadd.f32 %v145, %v137
    %v150 = vsel %vm138, %v78, %v82
    %v151 = vsel %vm139, %v79, %v83
    %v152 = vsel %vm140, %v80, %v84
    %v153 = vsel %vm141, %v81, %v85
    %v154 = vadd.f32 %v150, %v110
    %v155 = vadd.f32 %v151, %v119
    %v156 = vadd.f32 %v152, %v128
    %v157 = vadd.f32 %v153, %v137
    %v158 = vmul.f32 %v154, -1.2
    %v159 = vmul.f32 %v155, -1.2
    %v160 = vmul.f32 %v156, -1.2
    %v161 = vmul.f32 %v157, -1.2
    %v162 = vmul.f32 %v158, 1.442695
    %v163 = vpow.pop %v162
    %v164 = vmul.f32 %v159, 1.442695
    %v165 = vpow.pop %v164
    %v166 = vmul.f32 %v160, 1.442695
    %v167 = vpow.pop %v166
    %v168 = vmul.f32 %v161, 1.442695
    %v169 = vpow.pop %v168
    %v170 = vsel %vm138, 0.7, 0.3
    %v171 = vsel %vm139, 0.7, 0.3
    %v172 = vsel %vm140, 0.7, 0.3
    %v173 = vsel %vm141, 0.7, 0.3
    %v174 = vmul.f32 %v170, %v163
    %v175 = vmul.f32 %v171, %v165
    %v176 = vmul.f32 %v172, %v167
    %v177 = vmul.f32 %v173, %v169
    %v178 = vmul.f32 %v174, %v146
    %v179 = vmul.f32 %v175, %v147
    %v180 = vmul.f32 %v176, %v148
    %v181 = vmul.f32 %v177, %v149
    %v182 = vld [vmem:[#allocation2] sm:$0xff]
    %v183 = vld [vmem:[#allocation2 + $0x8] sm:$0xff]
    %v184 = vadd.f32 %v178, %v180
    %v185 = vadd.f32 %v179, %v181
    %v186 = vadd.f32 %v182, %v184
    %v187 = vadd.f32 %v183, %v185
    %188 = vst [vmem:[#allocation2] sm:$0xff] %v186
    %189 = vst [vmem:[#allocation2 + $0x8] sm:$0xff] %v187
    // Predicated region
    $region22: #{tpu_custom_call.1} parent=1 // pred_check
      _
    $region23: #{tpu_custom_call.1} parent=1 // pred_check_branch
      %191 = sbr.rel (%p64) target = $region25
    $region24: #{tpu_custom_call.1} parent=1 // pred_region
      %v192 = vld [vmem:[#allocation2] sm:$0xff]
      %v193 = vld [vmem:[#allocation2 + $0x8] sm:$0xff]
      %v194 = vadd.f32 %v192, %v193
      %195 = vadd.xlane.f32.xlu0 %v194
      %v196 = vpop.xlane.xlu0 %195
      %v197 = vrot.slane %v196, 4
      %v198 = vadd.f32 %v196, %v197
      %v199 = vrot.slane %v198, 2
      %v200 = vadd.f32 %v198, %v199
      %v201 = vrot.slane %v200, 1
      %v202 = vadd.f32 %v200, %v201
      %s203 = vtos %v202
      %v204 = vstv %s203
      %205 = vst [vmem:[#allocation8] sm:$0xff] %v204
    $region25: #{tpu_custom_call.1} parent=1 // pred_fallthru
      _
    // Predicated region
    $region26: #{tpu_custom_call.1} parent=1 // pred_check
      _
    $region27: #{tpu_custom_call.1} parent=1 // pred_check_branch
      %207 = sbr.rel (0) target = $region29
    $region28: #{tpu_custom_call.1} parent=1 // pred_region
      %s209 = ssub.s32 128, 128
      %210 = vsyncadd [#allocation5], %s209
      %s212 = sshll.u32 [#allocation8], 4
      %s213 = int_to_ptr.vmem [resolvable:$true] %s212
      %215 = dma.vmem_to_hbm [thread:$0]  %s213, 128, %s2, [#allocation5]
    $region29: #{tpu_custom_call.1} parent=1 // pred_fallthru
      _
    // Predicated region
    $region30: #{tpu_custom_call.1} parent=1 // pred_check
      _
    $region31: #{tpu_custom_call.1} parent=1 // pred_check_branch
      %217 = sbr.rel (0) target = $region33
    $region32: #{tpu_custom_call.1} parent=1 // pred_region
      %218 = dma.done [#allocation5], 128
    $region33: #{tpu_custom_call.1} parent=1 // pred_fallthru
      _
    %219 = vsyncpa [#allocation4], 1
    %220 = vsyncpa [#allocation7], 1
    %221 = vsyncpa [#allocation5], 1

</llo_original>
